<compile_context>
chip_gen: v6e
topology: v6e:2x2x1
jax: 0.10.0
libtpu: 0.0.40
codegen_flags: <defaults>
</compile_context>

<pallas_src>
import functools
import math

import jax
import jax.numpy as jnp
from jax.experimental import pallas as pl
from jax.experimental.pallas import tpu as pltpu


def _round_up(x, m):
    return ((x + m - 1) // m) * m


def _fused_mlp_kernel(flags_ref, x_ref, w1_ref, b1_ref, w2_ref, b2_ref,
                      o_lidar_ref, o_radar_ref, h_ref, *, approximate_gelu):
    """One row tile: out = maybe_gelu(x @ W1 + b1) @ W2 + b2.

    flags_ref : SMEM (num_tiles,) int32 — 1 = lidar tile (apply GELU), 0 = radar.
    W1/b1 for the current tile were already selected by the index_map (stacked
    adapter weights indexed with flags[i]); the kernel gates the GELU and picks
    which output array receives the tile.
    """
    i = pl.program_id(0)
    is_lidar = flags_ref[i] == 1

    # Layer 1 on the MXU (bf16 inputs, f32 accumulation); bias add in f32 on the
    # VPU (safe on v5e which has no bf16 VPU).
    h_ref[...] = (jnp.dot(x_ref[...], w1_ref[...],
                          preferred_element_type=jnp.float32) + b1_ref[...])

    # GELU only on lidar tiles — radar tiles skip the polynomial entirely.
    @pl.when(is_lidar)
    def _():
        h = h_ref[...]
        if approximate_gelu:
            # tanh approximation -> single EUP op (frees VALU slots on v7x/v6e).
            h_ref[...] = jax.nn.gelu(h, approximate=True)
        else:
            # Exact GELU: matches PyTorch nn.GELU default 0.5*x*(1+erf(x/sqrt(2))).
            inv_sqrt2 = jnp.float32(1.0 / math.sqrt(2.0))
            h_ref[...] = 0.5 * h * (1.0 + jax.lax.erf(h * inv_sqrt2))

    # Shared projection on the MXU (bf16 inputs, f32 accumulation).
    out = (jnp.dot(h_ref[...].astype(w2_ref.dtype), w2_ref[...],
                   preferred_element_type=jnp.float32) + b2_ref[...]
           ).astype(o_lidar_ref.dtype)

    @pl.when(is_lidar)
    def _():
        o_lidar_ref[...] = out

    @pl.when(jnp.logical_not(is_lidar))
    def _():
        o_radar_ref[...] = out


def prepare_hetero_align_params(params, compute_dtype=jnp.bfloat16):
    """Pad / stack / cast the weights ONCE (hoisted out of the jitted forward)."""
    lidar_dim, ada_dim = params["lidar_w"].shape
    radar_dim = params["radar_w"].shape[0]
    proj_dim = params["proj_w"].shape[1]
    # Lane-dense output assumption: output stores stay unmasked vst.
    assert proj_dim % 128 == 0, "proj_dim must be a multiple of 128"

    in_dim_pad = max(lidar_dim, radar_dim)     # do NOT pad to 128 (would 8x x reads)
    ada_dim_pad = _round_up(ada_dim, 128)      # lane-dense intermediate / MXU K

    def pad2(a, rows, cols):
        return jnp.pad(a, ((0, rows - a.shape[0]), (0, cols - a.shape[1])))

    # Stacked first-layer weights: index 0 = radar adapter, index 1 = lidar adapter.
    w1s = jnp.stack(
        [pad2(params["radar_w"], in_dim_pad, ada_dim_pad),
         pad2(params["lidar_w"], in_dim_pad, ada_dim_pad)], axis=0
    ).astype(compute_dtype)
    b1s = jnp.stack(
        [pad2(params["radar_b"].reshape(1, -1), 1, ada_dim_pad),
         pad2(params["lidar_b"].reshape(1, -1), 1, ada_dim_pad)], axis=0
    ).astype(jnp.float32)
    w2 = pad2(params["proj_w"], ada_dim_pad, proj_dim).astype(compute_dtype)
    b2 = params["proj_b"].reshape(1, -1).astype(jnp.float32)
    return {"w1s": w1s, "b1s": b1s, "w2": w2, "b2": b2}


def hetero_align_forward(lidar, radar, prep, *, tile_n=2048,
                         out_dtype=jnp.bfloat16, approximate_gelu=False):
    """JAX/Pallas equivalent of HeteroAlign.forward -> (proj_lidar, proj_radar)."""
    n_l, lidar_dim = lidar.shape
    n_r, radar_dim = radar.shape
    assert n_l > 0 and n_r > 0, "both streams must be non-empty"

    w1s, b1s, w2, b2 = prep["w1s"], prep["b1s"], prep["w2"], prep["b2"]
    in_dim_pad = w1s.shape[1]
    ada_dim_pad = w1s.shape[2]
    proj_dim = w2.shape[1]
    compute_dtype = w1s.dtype
    assert lidar_dim <= in_dim_pad and radar_dim <= in_dim_pad

    # Big tiles amortize the ~0.35us per-grid-step overhead; clamp for small
    # inputs and keep a multiple of 16 (bf16 sublane packing).
    tile_n = max(16, min(tile_n, _round_up(max(n_l, n_r), 16)))

    n_l_tiles = -(-n_l // tile_n)
    n_r_tiles = -(-n_r // tile_n)
    n_l_pad = n_l_tiles * tile_n
    n_r_pad = n_r_tiles * tile_n
    num_tiles = n_l_tiles + n_r_tiles
    n_total = num_tiles * tile_n

    def pad2(a, rows, cols):
        return jnp.pad(a, ((0, rows - a.shape[0]), (0, cols - a.shape[1])))

    # Row-pad each stream to a tile boundary, feature-pad to the shared width,
    # then concatenate so every grid step handles exactly one stream. x is tiny
    # (<= 64 B/row) so this concat is negligible vs the 512 B/row output.
    x = jnp.concatenate(
        [pad2(lidar, n_l_pad, in_dim_pad), pad2(radar, n_r_pad, in_dim_pad)], axis=0
    ).astype(compute_dtype)

    # Per-tile stream flag (scalar-prefetched into SMEM; also drives index_maps).
    flags = jnp.concatenate(
        [jnp.ones((n_l_tiles,), jnp.int32), jnp.zeros((n_r_tiles,), jnp.int32)]
    )

    # Output index maps: each output advances only during its own stream's tiles
    # and stays pinned on an already-written block otherwise, so the resident
    # VMEM buffer is only ever written back with valid data.  (Requires the grid
    # to run sequentially -> "arbitrary" dimension semantics below.)
    lidar_out_map = lambda i, f: (jnp.minimum(i, n_l_tiles - 1), 0)
    radar_out_map = lambda i, f: (jnp.maximum(i - n_l_tiles, 0), 0)

    grid_spec = pltpu.PrefetchScalarGridSpec(
        num_scalar_prefetch=1,
        grid=(num_tiles,),
        in_specs=[
            # activations: tiled over rows only (feature dims never split)
            pl.BlockSpec((tile_n, in_dim_pad), lambda i, f: (i, 0)),
            # per-stream adapter weights/bias, selected by the prefetched flag
            pl.BlockSpec((None, in_dim_pad, ada_dim_pad), lambda i, f: (f[i], 0, 0)),
            pl.BlockSpec((None, 1, ada_dim_pad), lambda i, f: (f[i], 0, 0)),
            # shared projection: constant index_map -> stays VMEM-resident
            pl.BlockSpec((ada_dim_pad, proj_dim), lambda i, f: (0, 0)),
            pl.BlockSpec((1, proj_dim), lambda i, f: (0, 0)),
        ],
        out_specs=[
            pl.BlockSpec((tile_n, proj_dim), lidar_out_map),
            pl.BlockSpec((tile_n, proj_dim), radar_out_map),
        ],
        scratch_shapes=[pltpu.VMEM((tile_n, ada_dim_pad), jnp.float32)],
    )

    w_bytes = jnp.dtype(compute_dtype).itemsize
    o_bytes = jnp.dtype(out_dtype).itemsize
    cost = pl.CostEstimate(
        flops=2 * n_total * (in_dim_pad * ada_dim_pad + ada_dim_pad * proj_dim),
        transcendentals=n_l_pad * ada_dim_pad,   # erf/tanh only on lidar tiles now
        bytes_accessed=(x.size * w_bytes
                        + (n_l_pad + n_r_pad) * proj_dim * o_bytes
                        + w1s.size * w_bytes + w2.size * w_bytes
                        + b1s.size * 4 + b2.size * 4 + num_tiles * 4),
    )

    out_l, out_r = pl.pallas_call(
        functools.partial(_fused_mlp_kernel, approximate_gelu=approximate_gelu),
        out_shape=(jax.ShapeDtypeStruct((n_l_pad, proj_dim), out_dtype),
                   jax.ShapeDtypeStruct((n_r_pad, proj_dim), out_dtype)),
        grid_spec=grid_spec,
        compiler_params=pltpu.CompilerParams(
            # "arbitrary": the pinned output index maps above rely on sequential
            # grid execution; measured "parallel" vs "arbitrary" delta is ~0.
            dimension_semantics=("arbitrary",),
            # ~6 MiB used at tile_n=2048 with bf16 output (double-buffered I/O +
            # 1 MiB f32 scratch); 32 MiB is safe on v5e/v6e (128 MiB) and v7x (64).
            vmem_limit_bytes=32 * 1024 * 1024,
        ),
        cost_estimate=cost,
    )(flags, x, w1s, b1s, w2, b2)

    # Fast path: no copy at all when the row counts divide the tile; otherwise
    # only the valid rows are copied (no concatenated-buffer re-stream anymore).
    proj_lidar = out_l if n_l == n_l_pad else out_l[:n_l]
    proj_radar = out_r if n_r == n_r_pad else out_r[:n_r]
    return proj_lidar, proj_radar


def init_params(key, lidar_dim, radar_dim, ada_dim=64, proj_dim=256, dtype=jnp.float32):
    """Deterministic synthetic init (uniform, Kaiming-like bound as in nn.Linear)."""
    ks = jax.random.split(key, 6)

    def lin(kw, kb, fan_in, fan_out):
        bound = 1.0 / math.sqrt(fan_in)
        w = jax.random.uniform(kw, (fan_in, fan_out), dtype, -bound, bound)
        b = jax.random.uniform(kb, (1, fan_out), dtype, -bound, bound)
        return w, b

    lw, lb = lin(ks[0], ks[1], lidar_dim, ada_dim)
    rw, rb = lin(ks[2], ks[3], radar_dim, ada_dim)
    pw, pb = lin(ks[4], ks[5], ada_dim, proj_dim)
    return {
        "lidar_w": lw, "lidar_b": lb,
        "radar_w": rw, "radar_b": rb,
        "proj_w": pw, "proj_b": pb,
    }


def _reference(lidar, radar, p, compute_dtype=jnp.bfloat16):
    """Pure-JAX reference mirroring the kernel's bf16-in / f32-accumulate precision."""
    f32 = jnp.float32
    c = lambda a: a.astype(compute_dtype).astype(f32)
    h_l = c(lidar) @ c(p["lidar_w"]) + p["lidar_b"]
    h_l = 0.5 * h_l * (1.0 + jax.lax.erf(h_l * f32(1.0 / math.sqrt(2.0))))
    h_r = c(radar) @ c(p["radar_w"]) + p["radar_b"]
    out_l = c(h_l) @ c(p["proj_w"]) + p["proj_b"]
    out_r = c(h_r) @ c(p["proj_w"]) + p["proj_b"]
    return out_l, out_r


if __name__ == "__main__":
    LIDAR_DIM, RADAR_DIM, ADA_DIM, PROJ_DIM = 16, 8, 64, 256
    N_LIDAR, N_RADAR = 64, 32

    key = jax.random.PRNGKey(0)
    k_lid, k_rad, k_par = jax.random.split(key, 3)

    lidar = jax.random.normal(k_lid, (N_LIDAR, LIDAR_DIM), jnp.float32)
    radar = jax.random.normal(k_rad, (N_RADAR, RADAR_DIM), jnp.float32)
    params = init_params(k_par, LIDAR_DIM, RADAR_DIM, ADA_DIM, PROJ_DIM)

    # Weight padding / casting done once, outside the jitted forward.
    prep = prepare_hetero_align_params(params)

    # Default tile_n=2048 auto-clamps to 64 rows at these toy sizes; at production
    # point counts it targets the HBM roofline while staying well inside VMEM.
    fwd = jax.jit(hetero_align_forward)
    out_l, out_r = fwd(lidar, radar, prep)
    jax.block_until_ready((out_l, out_r))

    ref_l, ref_r = _reference(lidar, radar, params)
    assert out_l.shape == (N_LIDAR, PROJ_DIM) and out_r.shape == (N_RADAR, PROJ_DIM)
    ol = out_l.astype(jnp.float32)
    orr = out_r.astype(jnp.float32)
    # bf16 MXU inputs + bf16 output with f32 accumulation -> loose tolerance.
    assert jnp.allclose(ol, ref_l, atol=2e-2, rtol=2e-2), float(jnp.max(jnp.abs(ol - ref_l)))
    assert jnp.allclose(orr, ref_r, atol=2e-2, rtol=2e-2), float(jnp.max(jnp.abs(orr - ref_r)))

    print("KERNEL_OK")
</pallas_src>

<mosaic_0001>
module attributes {stable_mosaic.version = 11 : i64} {
  func.func @_fused_mlp_kernel(%arg0: i32, %arg1: memref<2xi32, #tpu.memory_space<smem>>, %arg2: memref<64x16xbf16, #tpu.memory_space<vmem>>, %arg3: memref<1x16x128xbf16, #tpu.memory_space<vmem>>, %arg4: memref<1x1x128xf32, #tpu.memory_space<vmem>>, %arg5: memref<128x256xbf16, #tpu.memory_space<vmem>>, %arg6: memref<1x256xf32, #tpu.memory_space<vmem>>, %arg7: memref<64x256xbf16, #tpu.memory_space<vmem>>, %arg8: memref<64x256xbf16, #tpu.memory_space<vmem>>, %arg9: memref<64x128xf32, #tpu.memory_space<vmem>>) attributes {dimension_semantics = [#tpu.dimension_semantics<arbitrary>], iteration_bounds = array<i64: 2>, scalar_prefetch = 1 : i64, scratch_operands = 1 : i64, tpu.core_type = #tpu.core_type<tc>, window_params = [{transform_indices = @transform_0, window_bounds = array<i64: 64, 16>}, {transform_indices = @transform_1, window_bounds = array<i64: 1, 16, 128>}, {transform_indices = @transform_2, window_bounds = array<i64: 1, 1, 128>}, {pipeline_mode = #tpu.pipeline_mode<synchronous>, transform_indices = @transform_3, window_bounds = array<i64: 128, 256>}, {pipeline_mode = #tpu.pipeline_mode<synchronous>, transform_indices = @transform_4, window_bounds = array<i64: 1, 256>}, {transform_indices = @transform_5, window_bounds = array<i64: 64, 256>}, {transform_indices = @transform_6, window_bounds = array<i64: 64, 256>}]} {
    %0 = arith.index_cast %arg0 : i32 to index
    %1 = memref.load %arg1[%0] : memref<2xi32, #tpu.memory_space<smem>>
    %c1_i32 = arith.constant 1 : i32
    %2 = arith.cmpi eq, %1, %c1_i32 : i32
    %c0 = arith.constant 0 : index
    %c0_0 = arith.constant 0 : index
    %3 = vector.load %arg2[%c0, %c0_0] : memref<64x16xbf16, #tpu.memory_space<vmem>>, vector<64x16xbf16>
    %c0_1 = arith.constant 0 : index
    %c0_2 = arith.constant 0 : index
    %c0_3 = arith.constant 0 : index
    %4 = vector.load %arg3[%c0_1, %c0_2, %c0_3] : memref<1x16x128xbf16, #tpu.memory_space<vmem>>, vector<1x16x128xbf16>
    %5 = vector.shape_cast %4 : vector<1x16x128xbf16> to vector<16x128xbf16>
    %cst = arith.constant dense<0.000000e+00> : vector<64x128xf32>
    %6 = tpu.matmul %3, %5, %cst {dimension_numbers = #tpu.dot_dimension_numbers<[1], [0], [0], [1], [0, 0, 1, 1], [], []>} : vector<64x16xbf16>, vector<16x128xbf16>, vector<64x128xf32> -> vector<64x128xf32>
    %c0_4 = arith.constant 0 : index
    %c0_5 = arith.constant 0 : index
    %c0_6 = arith.constant 0 : index
    %7 = vector.load %arg4[%c0_4, %c0_5, %c0_6] : memref<1x1x128xf32, #tpu.memory_space<vmem>>, vector<1x1x128xf32>
    %8 = vector.shape_cast %7 : vector<1x1x128xf32> to vector<1x128xf32>
    %9 = vector.broadcast %8 : vector<1x128xf32> to vector<64x128xf32>
    %10 = arith.addf %6, %9 : vector<64x128xf32>
    %c0_7 = arith.constant 0 : index
    %c0_8 = arith.constant 0 : index
    %11 = vector.load %arg9[%c0_7, %c0_8] : memref<64x128xf32, #tpu.memory_space<vmem>>, vector<64x128xf32>
    tpu.vector_store %arg9[%c0_7, %c0_8], %10 {strides = array<i32>} : memref<64x128xf32, #tpu.memory_space<vmem>>, vector<64x128xf32>,
    %12 = arith.extui %2 : i1 to i32
    %c0_i32 = arith.constant 0 : i32
    %13 = arith.cmpi ne, %12, %c0_i32 : i32
    scf.if %13 {
      %c0_18 = arith.constant 0 : index
      %c0_19 = arith.constant 0 : index
      %27 = vector.load %arg9[%c0_18, %c0_19] : memref<64x128xf32, #tpu.memory_space<vmem>>, vector<64x128xf32>
      %cst_20 = arith.constant 5.000000e-01 : f32
      %28 = vector.broadcast %cst_20 : f32 to vector<64x128xf32>
      %29 = arith.mulf %28, %27 : vector<64x128xf32>
      %cst_21 = arith.constant 0.707106769 : f32
      %30 = vector.broadcast %cst_21 : f32 to vector<64x128xf32>
      %31 = arith.mulf %27, %30 : vector<64x128xf32>
      %32 = math.erf %31 : vector<64x128xf32>
      %cst_22 = arith.constant 1.000000e+00 : f32
      %33 = vector.broadcast %cst_22 : f32 to vector<64x128xf32>
      %34 = arith.addf %33, %32 : vector<64x128xf32>
      %35 = arith.mulf %29, %34 : vector<64x128xf32>
      %c0_23 = arith.constant 0 : index
      %c0_24 = arith.constant 0 : index
      %36 = vector.load %arg9[%c0_23, %c0_24] : memref<64x128xf32, #tpu.memory_space<vmem>>, vector<64x128xf32>
      tpu.vector_store %arg9[%c0_23, %c0_24], %35 {strides = array<i32>} : memref<64x128xf32, #tpu.memory_space<vmem>>, vector<64x128xf32>,
    } else {
    }
    %c0_9 = arith.constant 0 : index
    %c0_10 = arith.constant 0 : index
    %14 = vector.load %arg9[%c0_9, %c0_10] : memref<64x128xf32, #tpu.memory_space<vmem>>, vector<64x128xf32>
    %15 = arith.truncf %14 : vector<64x128xf32> to vector<64x128xbf16>
    %c0_11 = arith.constant 0 : index
    %c0_12 = arith.constant 0 : index
    %16 = vector.load %arg5[%c0_11, %c0_12] : memref<128x256xbf16, #tpu.memory_space<vmem>>, vector<128x256xbf16>
    %cst_13 = arith.constant dense<0.000000e+00> : vector<64x256xf32>
    %17 = tpu.matmul %15, %16, %cst_13 {dimension_numbers = #tpu.dot_dimension_numbers<[1], [0], [0], [1], [0, 0, 1, 1], [], []>} : vector<64x128xbf16>, vector<128x256xbf16>, vector<64x256xf32> -> vector<64x256xf32>
    %c0_14 = arith.constant 0 : index
    %c0_15 = arith.constant 0 : index
    %18 = vector.load %arg6[%c0_14, %c0_15] : memref<1x256xf32, #tpu.memory_space<vmem>>, vector<1x256xf32>
    %19 = vector.broadcast %18 : vector<1x256xf32> to vector<64x256xf32>
    %20 = arith.addf %17, %19 : vector<64x256xf32>
    %21 = arith.truncf %20 : vector<64x256xf32> to vector<64x256xbf16>
    %22 = arith.extui %2 : i1 to i32
    %c0_i32_16 = arith.constant 0 : i32
    %23 = arith.cmpi ne, %22, %c0_i32_16 : i32
    scf.if %23 {
      %c0_18 = arith.constant 0 : index
      %c0_19 = arith.constant 0 : index
      %27 = vector.load %arg7[%c0_18, %c0_19] : memref<64x256xbf16, #tpu.memory_space<vmem>>, vector<64x256xbf16>
      tpu.vector_store %arg7[%c0_18, %c0_19], %21 {strides = array<i32>} : memref<64x256xbf16, #tpu.memory_space<vmem>>, vector<64x256xbf16>,
    } else {
    }
    %true = arith.constant true
    %24 = arith.xori %2, %true : i1
    %25 = arith.extui %24 : i1 to i32
    %c0_i32_17 = arith.constant 0 : i32
    %26 = arith.cmpi ne, %25, %c0_i32_17 : i32
    scf.if %26 {
      %c0_18 = arith.constant 0 : index
      %c0_19 = arith.constant 0 : index
      %27 = vector.load %arg8[%c0_18, %c0_19] : memref<64x256xbf16, #tpu.memory_space<vmem>>, vector<64x256xbf16>
      tpu.vector_store %arg8[%c0_18, %c0_19], %21 {strides = array<i32>} : memref<64x256xbf16, #tpu.memory_space<vmem>>, vector<64x256xbf16>,
    } else {
    }
    return
  }
  func.func @transform_0(%arg0: i32, %arg1: memref<2xi32, #tpu.memory_space<smem>>) -> (i32, i32) {
    %c0_i32 = arith.constant 0 : i32
    %c0_i32_0 = arith.constant 0 : i32
    return %arg0, %c0_i32 : i32, i32
  }
  func.func @transform_1(%arg0: i32, %arg1: memref<2xi32, #tpu.memory_space<smem>>) -> (i32, i32, i32) {
    %0 = arith.index_cast %arg0 : i32 to index
    %1 = memref.load %arg1[%0] : memref<2xi32, #tpu.memory_space<smem>>
    %c0_i32 = arith.constant 0 : i32
    %c0_i32_0 = arith.constant 0 : i32
    %c0_i32_1 = arith.constant 0 : i32
    return %1, %c0_i32, %c0_i32_0 : i32, i32, i32
  }
  func.func @transform_2(%arg0: i32, %arg1: memref<2xi32, #tpu.memory_space<smem>>) -> (i32, i32, i32) {
    %0 = arith.index_cast %arg0 : i32 to index
    %1 = memref.load %arg1[%0] : memref<2xi32, #tpu.memory_space<smem>>
    %c0_i32 = arith.constant 0 : i32
    %c0_i32_0 = arith.constant 0 : i32
    %c0_i32_1 = arith.constant 0 : i32
    return %1, %c0_i32, %c0_i32_0 : i32, i32, i32
  }
  func.func @transform_3(%arg0: i32, %arg1: memref<2xi32, #tpu.memory_space<smem>>) -> (i32, i32) {
    %c0_i32 = arith.constant 0 : i32
    %c0_i32_0 = arith.constant 0 : i32
    %c0_i32_1 = arith.constant 0 : i32
    return %c0_i32, %c0_i32_0 : i32, i32
  }
  func.func @transform_4(%arg0: i32, %arg1: memref<2xi32, #tpu.memory_space<smem>>) -> (i32, i32) {
    %c0_i32 = arith.constant 0 : i32
    %c0_i32_0 = arith.constant 0 : i32
    %c0_i32_1 = arith.constant 0 : i32
    return %c0_i32, %c0_i32_0 : i32, i32
  }
  func.func @transform_5(%arg0: i32, %arg1: memref<2xi32, #tpu.memory_space<smem>>) -> (i32, i32) {
    %c0_i32 = arith.constant 0 : i32
    %0 = arith.minsi %arg0, %c0_i32 : i32
    %c0_i32_0 = arith.constant 0 : i32
    %c0_i32_1 = arith.constant 0 : i32
    return %0, %c0_i32_0 : i32, i32
  }
  func.func @transform_6(%arg0: i32, %arg1: memref<2xi32, #tpu.memory_space<smem>>) -> (i32, i32) {
    %c1_i32 = arith.constant 1 : i32
    %0 = arith.subi %arg0, %c1_i32 : i32
    %c0_i32 = arith.constant 0 : i32
    %1 = arith.maxsi %0, %c0_i32 : i32
    %c0_i32_0 = arith.constant 0 : i32
    %c0_i32_1 = arith.constant 0 : i32
    return %1, %c0_i32_0 : i32, i32
  }
}

</mosaic_0001>

<llo_original>
// kernel: hetero_align_forward.1
$region0: #{hetero_align_forward.1}
  #allocation0 [shape = 'u32[]', space=smem, size = 0x4, offset = 0x4, fixed_abs, tag = 'smem constant byte address 0x4 - core index']
  #allocation1 [shape = 'u32[144,128]{1,0:T(1,128)}', space=vmem, size = 0x12000, scoped, tag = 'internal scratch']
  #allocation2 [shape = 'f32[64,128]{1,0:T(8,128)}', space=vmem, size = 0x8000, scoped, tag = 'scratch operand']
  #allocation3 [shape = 's32[1]{0}', space=sflag, size = 0x4, scoped, tag = 'scoped memory for hetero_align_forward.1']
  #allocation4 [shape = 'u8[512]{0}', space=smem, size = 0x200, scoped, tag = 'prefetched SMEM operand 0']
  %s0 = inlined_call_operand.vmem [shape: s32[2], index: 0, kind: input, shape index: {}]
  %s1 = inlined_call_operand.vmem [shape: bf16[128,16], index: 1, kind: input, shape index: {}]
  %s2 = inlined_call_operand.hbm [shape: bf16[2,16,128], index: 2, kind: input, shape index: {}]
  %s3 = inlined_call_operand.vmem [shape: f32[2,1,128], index: 3, kind: input, shape index: {}]
  %s4 = inlined_call_operand.vmem [shape: bf16[128,256], index: 4, kind: input, shape index: {}]
  %s5 = inlined_call_operand.vmem [shape: f32[1,256], index: 5, kind: input, shape index: {}]
  %s6 = inlined_call_operand.hbm [shape: bf16[64,256], index: 6, kind: output, shape index: {0}]
  %s7 = inlined_call_operand.vmem [shape: bf16[64,256], index: 7, kind: output, shape index: {1}]
  %8 = xla_tuple %s6, %s7
  %s9 = sld [smem:[#allocation0]]
  $region77: #{hetero_align_forward.1} parent=0
    _
  %s11 = ssub.s32 1, %s9
  %s12 = scalar_select 0, %s11, %s9
  %s13 = sshll.u32 %s0, 4
  %s14 = int_to_ptr.vmem [resolvable:$true] %s13
  %16 = dma.vmem_to_smem %s14, 16, [#allocation4], [#allocation3]
  %17 = dma.done [#allocation3], 16
  %18 = sfence
  $region1: #{hetero_align_forward.1} parent=0
    #allocation5 [shape = 'u8[8192]{0}', space=vmem, size = 0x2000, scoped, tag = 'input window, operand 2']
    #allocation6 [shape = 's32[2]{0}', space=sflag, size = 0x8, scoped, tag = 'scoped memory for hetero_align_forward.1']
    #allocation7 [shape = 's32[2]{0}', space=sflag, size = 0x8, scoped, tag = 'scoped memory for hetero_align_forward.1']
    #allocation8 [shape = 'u8[65536]{0}', space=vmem, size = 0x10000, scoped, tag = 'output window, operand 0']
    %19 = vsyncpa [#allocation6], 0
    %s20 = scalar_lea.sflag [#allocation6], 1
    %21 = vsyncpa %s20, 0
    %22 = vsyncpa [#allocation7], 0
    %s23 = scalar_lea.sflag [#allocation7], 1
    %24 = vsyncpa %s23, 0
    loop: start=0, step=1, limit=4
    $region2: #{hetero_align_forward.1} parent=1 // loop_pre_header
      _
    $region3: #{hetero_align_forward.1} parent=1 // loop_header
      %s26 = sphi 0, %s30
      %p27 = scmp.ge.s32.totalorder %s26, 4
      %s36 = sphi 0, %s38
      %s39 = sphi 0, %s36
      %s40 = sphi 0, %s39
      %s56 = sphi 0, %s40
      %s64 = sphi 0, %s66
      %s67 = sphi 0, %s64
      %s68 = sphi 0, %s67
      %s84 = sphi 0, %s68
      %s92 = sphi 0, %s94
      %s95 = sphi 0, %s92
      %s96 = sphi 0, %s95
      %s112 = sphi 0, %s96
      %s116 = sphi 0, %s116
      %s118 = sphi 0, %s116
      %s119 = sphi 0, %s118
      %s133 = sphi 0, %s119
      %s137 = sphi 0, %s137
      %s139 = sphi 0, %s137
      %s140 = sphi 0, %s139
      %s154 = sphi 0, %s140
      %s164 = sphi 0, %s166
      %s167 = sphi 0, %s164
      %s168 = sphi 0, %s167
      %s184 = sphi 0, %s168
      %s196 = sphi 0, %s198
      %s199 = sphi 0, %s196
      %s200 = sphi 0, %s199
      %s216 = sphi 0, %s200
    $region4: #{hetero_align_forward.1} parent=1 // loop_header_branch
      %29 = sbr.rel (%p27) target = $region8
    $region5: #{hetero_align_forward.1} parent=1 // loop_body
      %s31 = ssub.s32 %s26, 1
      %s32 = ssub.s32 %s26, 2
      %s33 = sadd.s32 %s26, 1
      %s34 = ssub.s32 %s26, %s33
      %p35 = scmp.eq.s32.totalorder %s34, 0
      %s37 = sadd.s32 %s36, 1
      %s38 = scalar_select %p35, %s36, %s37
      %p41 = pneg %p35
      %p42 = scmp.eq.s32.totalorder %s26, 1
      %p43 = por %p41, %p42
      %p44 = scmp.ne.s32.totalorder %s36, %s39
      %p45 = scmp.eq.s32.totalorder %s26, 0
      %p46 = por %p44, %p45
      %p47 = scmp.ne.s32.totalorder %s36, %s39
      %p48 = scmp.eq.s32.totalorder %s31, 1
      %p49 = por %p47, %p48
      %p50 = scmp.ne.s32.totalorder %s39, %s40
      %p51 = scmp.eq.s32.totalorder %s31, 0
      %p52 = por %p50, %p51
      %p53 = scmp.ne.s32.totalorder %s39, %s40
      %p54 = scmp.eq.s32.totalorder %s32, 1
      %p55 = por %p53, %p54
      %p57 = scmp.ne.s32.totalorder %s40, %s56
      %p58 = scmp.eq.s32.totalorder %s32, 0
      %p59 = por %p57, %p58
      %s60 = sld [smem:[#allocation4 + %s26]]
      %s61 = sld [smem:[#allocation4 + %s33]]
      %s62 = ssub.s32 %s60, %s61
      %p63 = scmp.eq.s32.totalorder %s62, 0
      %s65 = sadd.s32 %s64, 1
      %s66 = scalar_select %p63, %s64, %s65
      %p69 = pneg %p63
      %p70 = scmp.eq.s32.totalorder %s26, 1
      %p71 = por %p69, %p70
      %p72 = scmp.ne.s32.totalorder %s64, %s67
      %p73 = scmp.eq.s32.totalorder %s26, 0
      %p74 = por %p72, %p73
      %p75 = scmp.ne.s32.totalorder %s64, %s67
      %p76 = scmp.eq.s32.totalorder %s31, 1
      %p77 = por %p75, %p76
      %p78 = scmp.ne.s32.totalorder %s67, %s68
      %p79 = scmp.eq.s32.totalorder %s31, 0
      %p80 = por %p78, %p79
      %p81 = scmp.ne.s32.totalorder %s67, %s68
      %p82 = scmp.eq.s32.totalorder %s32, 1
      %p83 = por %p81, %p82
      %p85 = scmp.ne.s32.totalorder %s68, %s84
      %p86 = scmp.eq.s32.totalorder %s32, 0
      %p87 = por %p85, %p86
      %s88 = sld [smem:[#allocation4 + %s26]]
      %s89 = sld [smem:[#allocation4 + %s33]]
      %s90 = ssub.s32 %s88, %s89
      %p91 = scmp.eq.s32.totalorder %s90, 0
      %s93 = sadd.s32 %s92, 1
      %s94 = scalar_select %p91, %s92, %s93
      %p97 = pneg %p91
      %p98 = scmp.eq.s32.totalorder %s26, 1
      %p99 = por %p97, %p98
      %p100 = scmp.ne.s32.totalorder %s92, %s95
      %p101 = scmp.eq.s32.totalorder %s26, 0
      %p102 = por %p100, %p101
      %p103 = scmp.ne.s32.totalorder %s92, %s95
      %p104 = scmp.eq.s32.totalorder %s31, 1
      %p105 = por %p103, %p104
      %p106 = scmp.ne.s32.totalorder %s95, %s96
      %p107 = scmp.eq.s32.totalorder %s31, 0
      %p108 = por %p106, %p107
      %p109 = scmp.ne.s32.totalorder %s95, %s96
      %p110 = scmp.eq.s32.totalorder %s32, 1
      %p111 = por %p109, %p110
      %p113 = scmp.ne.s32.totalorder %s96, %s112
      %p114 = scmp.eq.s32.totalorder %s32, 0
      %p115 = por %p113, %p114
      %s117 = sadd.s32 %s116, 1
      %p120 = scmp.eq.s32.totalorder %s26, 1
      %p121 = scmp.ne.s32.totalorder %s116, %s118
      %p122 = scmp.eq.s32.totalorder %s26, 0
      %p123 = por %p121, %p122
      %p124 = scmp.ne.s32.totalorder %s116, %s118
      %p125 = scmp.eq.s32.totalorder %s31, 1
      %p126 = por %p124, %p125
      %p127 = scmp.ne.s32.totalorder %s118, %s119
      %p128 = scmp.eq.s32.totalorder %s31, 0
      %p129 = por %p127, %p128
      %p130 = scmp.ne.s32.totalorder %s118, %s119
      %p131 = scmp.eq.s32.totalorder %s32, 1
      %p132 = por %p130, %p131
      %p134 = scmp.ne.s32.totalorder %s119, %s133
      %p135 = scmp.eq.s32.totalorder %s32, 0
      %p136 = por %p134, %p135
      %s138 = sadd.s32 %s137, 1
      %p141 = scmp.eq.s32.totalorder %s26, 1
      %p142 = scmp.ne.s32.totalorder %s137, %s139
      %p143 = scmp.eq.s32.totalorder %s26, 0
      %p144 = por %p142, %p143
      %p145 = scmp.ne.s32.totalorder %s137, %s139
      %p146 = scmp.eq.s32.totalorder %s31, 1
      %p147 = por %p145, %p146
      %p148 = scmp.ne.s32.totalorder %s139, %s140
      %p149 = scmp.eq.s32.totalorder %s31, 0
      %p150 = por %p148, %p149
      %p151 = scmp.ne.s32.totalorder %s139, %s140
      %p152 = scmp.eq.s32.totalorder %s32, 1
      %p153 = por %p151, %p152
      %p155 = scmp.ne.s32.totalorder %s140, %s154
      %p156 = scmp.eq.s32.totalorder %s32, 0
      %p157 = por %p155, %p156
      %p158 = scmp.lt.s32.totalorder %s26, 0
      %s159 = scalar_select %p158, %s26, 0
      %p160 = scmp.lt.s32.totalorder %s33, 0
      %s161 = scalar_select %p160, %s33, 0
      %s162 = ssub.s32 %s159, %s161
      %p163 = scmp.eq.s32.totalorder %s162, 0
      %s165 = sadd.s32 %s164, 1
      %s166 = scalar_select %p163, %s164, %s165
      %p169 = pneg %p163
      %p170 = scmp.eq.s32.totalorder %s26, 1
      %p171 = por %p169, %p170
      %p172 = scmp.ne.s32.totalorder %s164, %s167
      %p173 = scmp.eq.s32.totalorder %s26, 0
      %p174 = por %p172, %p173
      %p175 = scmp.ne.s32.totalorder %s164, %s167
      %p176 = scmp.eq.s32.totalorder %s31, 1
      %p177 = por %p175, %p176
      %p178 = scmp.ne.s32.totalorder %s167, %s168
      %p179 = scmp.eq.s32.totalorder %s31, 0
      %p180 = por %p178, %p179
      %p181 = scmp.ne.s32.totalorder %s167, %s168
      %p182 = scmp.eq.s32.totalorder %s32, 1
      %p183 = por %p181, %p182
      %p185 = scmp.ne.s32.totalorder %s168, %s184
      %p186 = scmp.eq.s32.totalorder %s32, 0
      %p187 = por %p185, %p186
      %s188 = ssub.s32 %s26, 1
      %p189 = scmp.gt.s32.totalorder %s188, 0
      %s190 = scalar_select %p189, %s188, 0
      %s191 = ssub.s32 %s33, 1
      %p192 = scmp.gt.s32.totalorder %s191, 0
      %s193 = scalar_select %p192, %s191, 0
      %s194 = ssub.s32 %s190, %s193
      %p195 = scmp.eq.s32.totalorder %s194, 0
      %s197 = sadd.s32 %s196, 1
      %s198 = scalar_select %p195, %s196, %s197
      %p201 = pneg %p195
      %p202 = scmp.eq.s32.totalorder %s26, 1
      %p203 = por %p201, %p202
      %p204 = scmp.ne.s32.totalorder %s196, %s199
      %p205 = scmp.eq.s32.totalorder %s26, 0
      %p206 = por %p204, %p205
      %p207 = scmp.ne.s32.totalorder %s196, %s199
      %p208 = scmp.eq.s32.totalorder %s31, 1
      %p209 = por %p207, %p208
      %p210 = scmp.ne.s32.totalorder %s199, %s200
      %p211 = scmp.eq.s32.totalorder %s31, 0
      %p212 = por %p210, %p211
      %p213 = scmp.ne.s32.totalorder %s199, %s200
      %p214 = scmp.eq.s32.totalorder %s32, 1
      %p215 = por %p213, %p214
      %p217 = scmp.ne.s32.totalorder %s200, %s216
      %p218 = scmp.eq.s32.totalorder %s32, 0
      %p219 = por %p217, %p218
      %p220 = scmp.le.s32.totalorder 1, %s26
      %p221 = scmp.lt.s32.totalorder %s26, 3
      %p222 = pnand %p220, %p221
      %p223 = pneg %p222
      // Predicated region
      $region9: #{hetero_align_forward.1} parent=5 // pred_check
        _
      $region10: #{hetero_align_forward.1} parent=5 // pred_check_branch
        %225 = sbr.rel (%p222) target = $region12
      $region11: #{hetero_align_forward.1} parent=5 // pred_region
        %s226 = ssub.s32 %s26, 1
        // Predicated region
        $region13: #{hetero_align_forward.1} parent=11 // pred_check
          %p227 = pneg %p129
        $region14: #{hetero_align_forward.1} parent=11 // pred_check_branch
          %229 = sbr.rel (%p227) target = $region16
        $region15: #{hetero_align_forward.1} parent=11 // pred_region
          _
        $region16: #{hetero_align_forward.1} parent=11 // pred_fallthru
          _
        // Predicated region
        $region17: #{hetero_align_forward.1} parent=11 // pred_check
          %p230 = pneg %p150
        $region18: #{hetero_align_forward.1} parent=11 // pred_check_branch
          %232 = sbr.rel (%p230) target = $region20
        $region19: #{hetero_align_forward.1} parent=11 // pred_region
          _
        $region20: #{hetero_align_forward.1} parent=11 // pred_fallthru
          _
      $region12: #{hetero_align_forward.1} parent=5 // pred_fallthru
        _
      %p233 = scmp.lt.s32.totalorder %s26, 2
      // Predicated region
      $region21: #{hetero_align_forward.1} parent=5 // pred_check
        %p234 = pneg %p233
      $region22: #{hetero_align_forward.1} parent=5 // pred_check_branch
        %236 = sbr.rel (%p234) target = $region24
      $region23: #{hetero_align_forward.1} parent=5 // pred_region
        // Predicated region
        $region25: #{hetero_align_forward.1} parent=23 // pred_check
          %p237 = pneg %p46
        $region26: #{hetero_align_forward.1} parent=23 // pred_check_branch
          %239 = sbr.rel (%p237) target = $region28
        $region27: #{hetero_align_forward.1} parent=23 // pred_region
          %s240 = smul.u32 8, %s26
          %p241 = scmp.lt.s32.totalorder %s240, 15
          %s242 = scalar_select %p241, %s240, 15
          %s243 = smul.addr %s242, 4
          %s244 = scalar_lea.vmem %s1, %s243
          %s245 = smul.u32 8, %s26
        $region28: #{hetero_align_forward.1} parent=23 // pred_fallthru
          _
        // Predicated region
        $region29: #{hetero_align_forward.1} parent=23 // pred_check
          %p246 = pneg %p74
        $region30: #{hetero_align_forward.1} parent=23 // pred_check_branch
          %248 = sbr.rel (%p246) target = $region32
        $region31: #{hetero_align_forward.1} parent=23 // pred_region
          %s249 = sand.u32 %s64, 1
          %s250 = scalar_lea.sflag [#allocation6], %s249
          %s251 = sand.u32 %s64, 1
          %s252 = smul.addr %s251, 8
          %s253 = scalar_lea.vmem [#allocation5], %s252
          %s254 = sld [smem:[#allocation4 + %s26]]
          %s256 = ssub.s32 128, 128
          %257 = vsyncadd %s250, %s256
          %s258 = smul.addr %s254, 2
          %s259 = smul.addr %s258, 64
          %s260 = scalar_lea.hbm %s2, %s259
          %s261 = sshll.u32 %s253, 4
          %s262 = int_to_ptr.vmem [resolvable:$true] %s261
          %267 = dma.hbm_to_vmem [thread:$0]  %s260, 128, %s262, %s250, 64, 64, 4
        $region32: #{hetero_align_forward.1} parent=23 // pred_fallthru
          _
        // Predicated region
        $region33: #{hetero_align_forward.1} parent=23 // pred_check
          %p268 = pneg %p102
        $region34: #{hetero_align_forward.1} parent=23 // pred_check_branch
          %270 = sbr.rel (%p268) target = $region36
        $region35: #{hetero_align_forward.1} parent=23 // pred_region
          %s271 = sld [smem:[#allocation4 + %s26]]
          %p272 = scmp.lt.s32.totalorder %s271, 1
          %s273 = scalar_select %p272, %s271, 1
          %s274 = scalar_lea.vmem %s3, %s273
          %s275 = sld [smem:[#allocation4 + %s26]]
        $region36: #{hetero_align_forward.1} parent=23 // pred_fallthru
          _
      $region24: #{hetero_align_forward.1} parent=5 // pred_fallthru
        _
      %p276 = scmp.le.s32.totalorder 1, %s26
      %p277 = scmp.lt.s32.totalorder %s26, 3
      %p278 = pnand %p276, %p277
      %p279 = pneg %p278
      // Predicated region
      $region37: #{hetero_align_forward.1} parent=5 // pred_check
        _
      $region38: #{hetero_align_forward.1} parent=5 // pred_check_branch
        %281 = sbr.rel (%p278) target = $region40
      $region39: #{hetero_align_forward.1} parent=5 // pred_region
        %s282 = ssub.s32 %s26, 1
        %s283 = sand.u32 %s67, 1
        %s284 = scalar_lea.sflag [#allocation6], %s283
        %s285 = sand.u32 %s67, 1
        %s286 = smul.addr %s285, 8
        %s287 = scalar_lea.vmem [#allocation5], %s286
        // Predicated region
        $region41: #{hetero_align_forward.1} parent=39 // pred_check
          %p288 = pneg %p80
        $region42: #{hetero_align_forward.1} parent=39 // pred_check_branch
          %290 = sbr.rel (%p288) target = $region44
        $region43: #{hetero_align_forward.1} parent=39 // pred_region
          %291 = dma.done %s284, 128
        $region44: #{hetero_align_forward.1} parent=39 // pred_fallthru
          _
        %s292 = smul.u32 8, %s31
        %p293 = scmp.lt.s32.totalorder %s292, 15
        %s294 = scalar_select %p293, %s292, 15
        %s295 = smul.addr %s294, 4
        %s296 = scalar_lea.vmem %s1, %s295
        %p297 = pneg %p52
        %p298 = pneg %p49
        %s299 = sand.u32 %s67, 1
        %s300 = scalar_lea.sflag [#allocation6], %s299
        %s301 = sand.u32 %s67, 1
        %s302 = smul.addr %s301, 8
        %s303 = scalar_lea.vmem [#allocation5], %s302
        %p304 = pneg %p80
        %p305 = pneg %p77
        %s306 = sld [smem:[#allocation4 + %s31]]
        %p307 = scmp.lt.s32.totalorder %s306, 1
        %s308 = scalar_select %p307, %s306, 1
        %s309 = scalar_lea.vmem %s3, %s308
        %p310 = pneg %p108
        %p311 = pneg %p105
        %p312 = pneg %p129
        %p313 = pneg %p126
        %p314 = pneg %p150
        %p315 = pneg %p147
        %p316 = pneg %p180
        %p317 = pneg %p177
        %s318 = sand.u32 %s167, 1
        %s319 = scalar_lea.sflag [#allocation7], %s318
        %s320 = sand.u32 %s167, 1
        %s321 = smul.addr %s320, 64
        %s322 = scalar_lea.vmem [#allocation8], %s321
        %p323 = pneg %p212
        %p324 = pneg %p209
        %s325 = ssub.s32 %s31, 1
        %p326 = scmp.gt.s32.totalorder %s325, 0
        %s327 = scalar_select %p326, %s325, 0
        %s328 = smul.u32 8, %s327
        %p329 = scmp.lt.s32.totalorder %s328, 7
        %s330 = scalar_select %p329, %s328, 7
        %s331 = smul.addr %s330, 2
        %s332 = smul.addr %s331, 4
        %s333 = scalar_lea.vmem %s7, %s332
        %s334 = smul.u32 8, %s31
        %p335 = scmp.lt.s32.totalorder %s334, 15
        %s336 = scalar_select %p335, %s334, 15
        %s337 = smul.addr %s336, 4
        %s338 = scalar_lea.vmem %s1, %s337
        %s339 = smul.u32 8, %s31
        %s340 = sld [smem:[#allocation4 + %s31]]
        %s341 = sld [smem:[#allocation4 + %s31]]
        %p342 = scmp.lt.s32.totalorder %s341, 1
        %s343 = scalar_select %p342, %s341, 1
        %s344 = scalar_lea.vmem %s3, %s343
        %s345 = sld [smem:[#allocation4 + %s31]]
        %p346 = scmp.lt.s32.totalorder %s31, 0
        %s347 = scalar_select %p346, %s31, 0
        %s348 = smul.u32 8, %s347
        %s349 = ssub.s32 %s31, 1
        %p350 = scmp.gt.s32.totalorder %s349, 0
        %s351 = scalar_select %p350, %s349, 0
        %s352 = smul.u32 8, %s351
        %p353 = scmp.lt.s32.totalorder %s352, 7
        %s354 = scalar_select %p353, %s352, 7
        %s355 = smul.addr %s354, 2
        %s356 = smul.addr %s355, 4
        %s357 = scalar_lea.vmem %s7, %s356
        %s358 = ssub.s32 %s31, 1
        %p359 = scmp.gt.s32.totalorder %s358, 0
        %s360 = scalar_select %p359, %s358, 0
        %s361 = smul.u32 8, %s360
        %s363 = sld [smem:[#allocation4 + %s31]]
        %p364 = scmp.eq.s32.totalorder %s363, 1
        %v365 = vld [vmem:[%s338] sm:$0xf]
        %v366 = vld [vmem:[%s338 + $0x4] sm:$0xf]
        %v367 = vld [vmem:[%s338 + $0x8] sm:$0xf]
        %v368 = vld [vmem:[%s338 + $0xc] sm:$0xf]
        %v369 = vld [vmem:[%s338 + $0x10] sm:$0xf]
        %v370 = vld [vmem:[%s338 + $0x14] sm:$0xf]
        %v371 = vld [vmem:[%s338 + $0x18] sm:$0xf]
        %v372 = vld [vmem:[%s338 + $0x1c] sm:$0xf]
        %v373 = vld [vmem:[%s287] sm:$0xf]
        %v374 = vld [vmem:[%s287 + $0x4] sm:$0xf]
        %v375 = vld [vmem:[%s344] sm:$0x1]
        %v377 = vlaneseq
        %v378 = vshrl.u32 %v377, 7
        %v379 = vsub.s32 0, %v378
        %v380 = vrot.slane %v375, %v379
        %v390 = vunpack.c.l.b16 %v365
        %v391 = vunpack.c.l.b16 %v366
        %v392 = vunpack.c.l.b16 %v367
        %v393 = vunpack.c.l.b16 %v368
        %v394 = vunpack.c.l.b16 %v369
        %v395 = vunpack.c.l.b16 %v370
        %v396 = vunpack.c.l.b16 %v371
        %v397 = vunpack.c.l.b16 %v372
        %v398 = vpack.c.b16 %v391, %v390
        %v399 = vpack.c.b16 %v393, %v392
        %v400 = vpack.c.b16 %v395, %v394
        %v401 = vpack.c.b16 %v397, %v396
        %v404 = vunpack.c.l.b16 %v373
        %v405 = vunpack.c.l.b16 %v374
        %v406 = vpack.c.b16 %v405, %v404
        %vm408 = vcmask 130048
        %v410 = vsel %vm408, %v398, 0
        %v413 = vsel %vm408, %v399, 0
        %v416 = vsel %vm408, %v400, 0
        %v419 = vsel %vm408, %v401, 0
        %421 = vmatprep.subr.bf16.mxu0 0
        %422 = vmatpush1.bf16.msra.mxu0 0
        %423 = vmatprep.subr.bf16.mxu0 0
        %424 = vmatpush1.bf16.msra.mxu0 0
        %425 = vmatprep.subr.bf16.mxu0 0
        %426 = vmatpush1.bf16.msra.mxu0 0
        %427 = vmatprep.subr.bf16.mxu0 0
        %428 = vmatpush1.bf16.msra.mxu0 0
        %429 = vmatprep.subr.bf16.mxu0 0
        %430 = vmatpush1.bf16.msra.mxu0 0
        %431 = vmatprep.subr.bf16.mxu0 0
        %432 = vmatpush1.bf16.msra.mxu0 0
        %433 = vmatprep.subr.bf16.mxu0 0
        %434 = vmatpush1.bf16.msra.mxu0 0
        %435 = vmatprep.subr.bf16.mxu0 0
        %436 = vmatpush1.bf16.msra.mxu0 %v406
        %437 = vmatprep.subr.bf16.mxu0 0
        %438 = vmatpush2.bf16.msra.mxu0 0
        %439 = vmatprep.subr.bf16.mxu0 0
        %440 = vmatpush2.bf16.msra.mxu0 0
        %441 = vmatprep.subr.bf16.mxu0 0
        %442 = vmatpush2.bf16.msra.mxu0 0
        %443 = vmatprep.subr.bf16.mxu0 0
        %444 = vmatpush2.bf16.msra.mxu0 0
        %445 = vmatprep.subr.bf16.mxu0 0
        %446 = vmatpush2.bf16.msra.mxu0 0
        %447 = vmatprep.subr.bf16.mxu0 0
        %448 = vmatpush2.bf16.msra.mxu0 0
        %449 = vmatprep.subr.bf16.mxu0 0
        %450 = vmatpush2.bf16.msra.mxu0 0
        %451 = vmatprep.subr.bf16.mxu0 0
        %452 = vmatpush2.bf16.msra.mxu0 0
        %453 = vmatprep.mubr.bf16.mxu0 0
        %454 = vmatmul.mubr.bf16.gmra.mxu0 %v410
        %v455 = vpop.f32.mrf.mxu0
        %v456 = vadd.f32 %v380, %v455
        %v457 = vpop.f32.mrf.mxu0
        %v458 = vpop.f32.mrf.mxu0
        %v459 = vadd.f32 %v380, %v458
        %v460 = vpop.f32.mrf.mxu0
        %461 = vmatprep.mubr.bf16.mxu0 0
        %462 = vmatmul.mubr.bf16.gmra.mxu0 %v413
        %v463 = vpop.f32.mrf.mxu0
        %v464 = vadd.f32 %v380, %v463
        %v465 = vpop.f32.mrf.mxu0
        %v466 = vpop.f32.mrf.mxu0
        %v467 = vadd.f32 %v380, %v466
        %v468 = vpop.f32.mrf.mxu0
        %469 = vmatprep.mubr.bf16.mxu0 0
        %470 = vmatmul.mubr.bf16.gmra.mxu0 %v416
        %v471 = vpop.f32.mrf.mxu0
        %v472 = vadd.f32 %v380, %v471
        %v473 = vpop.f32.mrf.mxu0
        %v474 = vpop.f32.mrf.mxu0
        %v475 = vadd.f32 %v380, %v474
        %v476 = vpop.f32.mrf.mxu0
        %477 = vmatprep.mubr.bf16.mxu0 0
        %478 = vmatmul.mubr.bf16.gmra.mxu0 %v419
        %v479 = vpop.f32.mrf.mxu0
        %v480 = vadd.f32 %v380, %v479
        %v481 = vpop.f32.mrf.mxu0
        %v482 = vpop.f32.mrf.mxu0
        %v483 = vadd.f32 %v380, %v482
        %v484 = vpop.f32.mrf.mxu0
        %485 = vdwg.mxu0
        %486 = vst [vmem:[#allocation2] sm:$0xff] %v456
        %487 = vst [vmem:[#allocation2 + $0x8] sm:$0xff] %v459
        %488 = vst [vmem:[#allocation2 + $0x10] sm:$0xff] %v464
        %489 = vst [vmem:[#allocation2 + $0x18] sm:$0xff] %v467
        %490 = vst [vmem:[#allocation2 + $0x20] sm:$0xff] %v472
        %491 = vst [vmem:[#allocation2 + $0x28] sm:$0xff] %v475
        %492 = vst [vmem:[#allocation2 + $0x30] sm:$0xff] %v480
        %493 = vst [vmem:[#allocation2 + $0x38] sm:$0xff] %v483
        // Predicated region
        $region45: #{hetero_align_forward.1} parent=39 // pred_check
          %p494 = pneg %p364
        $region46: #{hetero_align_forward.1} parent=39 // pred_check_branch
          %496 = sbr.rel (%p494) target = $region48
        $region47: #{hetero_align_forward.1} parent=39 // pred_region
          %v497 = vld [vmem:[#allocation2] sm:$0xff]
          %v498 = vld [vmem:[#allocation2 + $0x8] sm:$0xff]
          %v499 = vld [vmem:[#allocation2 + $0x10] sm:$0xff]
          %v500 = vld [vmem:[#allocation2 + $0x18] sm:$0xff]
          %v501 = vld [vmem:[#allocation2 + $0x20] sm:$0xff]
          %v502 = vld [vmem:[#allocation2 + $0x28] sm:$0xff]
          %v503 = vld [vmem:[#allocation2 + $0x30] sm:$0xff]
          %v504 = vld [vmem:[#allocation2 + $0x38] sm:$0xff]
          %v505 = vmul.f32 %v497, 0.5
          %v506 = vmul.f32 %v498, 0.5
          %v507 = vmul.f32 %v499, 0.5
          %v508 = vmul.f32 %v500, 0.5
          %v509 = vmul.f32 %v501, 0.5
          %v510 = vmul.f32 %v502, 0.5
          %v511 = vmul.f32 %v503, 0.5
          %v512 = vmul.f32 %v504, 0.5
          %v513 = vmul.f32 %v497, 0.70710677
          %v514 = vmul.f32 %v498, 0.70710677
          %v515 = vmul.f32 %v499, 0.70710677
          %v516 = vmul.f32 %v500, 0.70710677
          %v517 = vmul.f32 %v501, 0.70710677
          %v518 = vmul.f32 %v502, 0.70710677
          %v519 = vmul.f32 %v503, 0.70710677
          %v520 = vmul.f32 %v504, 0.70710677
          %v521 = verf.f32.pop %v513
          %v522 = verf.f32.pop %v514
          %v523 = verf.f32.pop %v515
          %v524 = verf.f32.pop %v516
          %v525 = verf.f32.pop %v517
          %v526 = verf.f32.pop %v518
          %v527 = verf.f32.pop %v519
          %v528 = verf.f32.pop %v520
          %v529 = vadd.f32 %v521, 1.0
          %v530 = vadd.f32 %v522, 1.0
          %v531 = vadd.f32 %v523, 1.0
          %v532 = vadd.f32 %v524, 1.0
          %v533 = vadd.f32 %v525, 1.0
          %v534 = vadd.f32 %v526, 1.0
          %v535 = vadd.f32 %v527, 1.0
          %v536 = vadd.f32 %v528, 1.0
          %v537 = vmul.f32 %v505, %v529
          %v538 = vmul.f32 %v506, %v530
          %v539 = vmul.f32 %v507, %v531
          %v540 = vmul.f32 %v508, %v532
          %v541 = vmul.f32 %v509, %v533
          %v542 = vmul.f32 %v510, %v534
          %v543 = vmul.f32 %v511, %v535
          %v544 = vmul.f32 %v512, %v536
          %545 = vst [vmem:[#allocation2] sm:$0xff] %v537
          %546 = vst [vmem:[#allocation2 + $0x8] sm:$0xff] %v538
          %547 = vst [vmem:[#allocation2 + $0x10] sm:$0xff] %v539
          %548 = vst [vmem:[#allocation2 + $0x18] sm:$0xff] %v540
          %549 = vst [vmem:[#allocation2 + $0x20] sm:$0xff] %v541
          %550 = vst [vmem:[#allocation2 + $0x28] sm:$0xff] %v542
          %551 = vst [vmem:[#allocation2 + $0x30] sm:$0xff] %v543
          %552 = vst [vmem:[#allocation2 + $0x38] sm:$0xff] %v544
        $region48: #{hetero_align_forward.1} parent=39 // pred_fallthru
          _
        %v553 = vld [vmem:[#allocation2] sm:$0xff]
        %v554 = vld [vmem:[#allocation2 + $0x8] sm:$0xff]
        %v555 = vld [vmem:[#allocation2 + $0x10] sm:$0xff]
        %v556 = vld [vmem:[#allocation2 + $0x18] sm:$0xff]
        %v557 = vld [vmem:[#allocation2 + $0x20] sm:$0xff]
        %v558 = vld [vmem:[#allocation2 + $0x28] sm:$0xff]
        %v559 = vld [vmem:[#allocation2 + $0x30] sm:$0xff]
        %v560 = vld [vmem:[#allocation2 + $0x38] sm:$0xff]
        %v561 = vpack.c.bf16 %v554, %v553
        %v562 = vpack.c.bf16 %v556, %v555
        %v563 = vpack.c.bf16 %v558, %v557
        %v564 = vpack.c.bf16 %v560, %v559
        %v565 = vld [vmem:[%s4] sm:$0xff]
        %v566 = vld [vmem:[%s4 + $0x8] sm:$0xff]
        %v567 = vld [vmem:[%s4 + $0x10] sm:$0xff]
        %v568 = vld [vmem:[%s4 + $0x18] sm:$0xff]
        %v569 = vld [vmem:[%s4 + $0x20] sm:$0xff]
        %v570 = vld [vmem:[%s4 + $0x28] sm:$0xff]
        %v571 = vld [vmem:[%s4 + $0x30] sm:$0xff]
        %v572 = vld [vmem:[%s4 + $0x38] sm:$0xff]
        %v573 = vld [vmem:[%s4 + $0x40] sm:$0xff]
        %v574 = vld [vmem:[%s4 + $0x48] sm:$0xff]
        %v575 = vld [vmem:[%s4 + $0x50] sm:$0xff]
        %v576 = vld [vmem:[%s4 + $0x58] sm:$0xff]
        %v577 = vld [vmem:[%s4 + $0x60] sm:$0xff]
        %v578 = vld [vmem:[%s4 + $0x68] sm:$0xff]
        %v579 = vld [vmem:[%s4 + $0x70] sm:$0xff]
        %v580 = vld [vmem:[%s4 + $0x78] sm:$0xff]
        %v581 = vld [vmem:[%s5] sm:$0x3]
        %v583 = vlaneseq
        %v584 = vshrl.u32 %v583, 7
        %v585 = vsub.s32 0, %v584
        %v586 = vrot.slane %v581, %v585
        %v587 = vlaneseq
        %v588 = vshrl.u32 %v587, 7
        %v589 = vsub.s32 1, %v588
        %v590 = vrot.slane %v581, %v589
        %v609 = vunpack.c.l.b16 %v565
        %v610 = vunpack.c.h.b16 %v565
        %v611 = vunpack.c.l.b16 %v566
        %v612 = vunpack.c.h.b16 %v566
        %v613 = vunpack.c.l.b16 %v567
        %v614 = vunpack.c.h.b16 %v567
        %v615 = vunpack.c.l.b16 %v568
        %v616 = vunpack.c.h.b16 %v568
        %v617 = vunpack.c.l.b16 %v569
        %v618 = vunpack.c.h.b16 %v569
        %v619 = vunpack.c.l.b16 %v570
        %v620 = vunpack.c.h.b16 %v570
        %v621 = vunpack.c.l.b16 %v571
        %v622 = vunpack.c.h.b16 %v571
        %v623 = vunpack.c.l.b16 %v572
        %v624 = vunpack.c.h.b16 %v572
        %v625 = vunpack.c.l.b16 %v573
        %v626 = vunpack.c.h.b16 %v573
        %v627 = vunpack.c.l.b16 %v574
        %v628 = vunpack.c.h.b16 %v574
        %v629 = vunpack.c.l.b16 %v575
        %v630 = vunpack.c.h.b16 %v575
        %v631 = vunpack.c.l.b16 %v576
        %v632 = vunpack.c.h.b16 %v576
        %v633 = vunpack.c.l.b16 %v577
        %v634 = vunpack.c.h.b16 %v577
        %v635 = vunpack.c.l.b16 %v578
        %v636 = vunpack.c.h.b16 %v578
        %v637 = vunpack.c.l.b16 %v579
        %v638 = vunpack.c.h.b16 %v579
        %v639 = vunpack.c.l.b16 %v580
        %v640 = vunpack.c.h.b16 %v580
        %v641 = vpack.c.b16 %v611, %v609
        %v642 = vpack.c.b16 %v612, %v610
        %v643 = vpack.c.b16 %v615, %v613
        %v644 = vpack.c.b16 %v616, %v614
        %v645 = vpack.c.b16 %v619, %v617
        %v646 = vpack.c.b16 %v620, %v618
        %v647 = vpack.c.b16 %v623, %v621
        %v648 = vpack.c.b16 %v624, %v622
        %v649 = vpack.c.b16 %v627, %v625
        %v650 = vpack.c.b16 %v628, %v626
        %v651 = vpack.c.b16 %v631, %v629
        %v652 = vpack.c.b16 %v632, %v630
        %v653 = vpack.c.b16 %v635, %v633
        %v654 = vpack.c.b16 %v636, %v634
        %v655 = vpack.c.b16 %v639, %v637
        %v656 = vpack.c.b16 %v640, %v638
        %673 = vmatprep.subr.bf16.mxu0 %v656
        %674 = vmatpush1.bf16.msra.mxu0 %v655
        %675 = vmatprep.subr.bf16.mxu0 %v654
        %676 = vmatpush1.bf16.msra.mxu0 %v653
        %677 = vmatprep.subr.bf16.mxu0 %v652
        %678 = vmatpush1.bf16.msra.mxu0 %v651
        %679 = vmatprep.subr.bf16.mxu0 %v650
        %680 = vmatpush1.bf16.msra.mxu0 %v649
        %681 = vmatprep.subr.bf16.mxu0 %v648
        %682 = vmatpush1.bf16.msra.mxu0 %v647
        %683 = vmatprep.subr.bf16.mxu0 %v646
        %684 = vmatpush1.bf16.msra.mxu0 %v645
        %685 = vmatprep.subr.bf16.mxu0 %v644
        %686 = vmatpush1.bf16.msra.mxu0 %v643
        %687 = vmatprep.subr.bf16.mxu0 %v642
        %688 = vmatpush1.bf16.msra.mxu0 %v641
        %689 = vmatprep.subr.bf16.mxu0 0
        %690 = vmatpush2.bf16.msra.mxu0 0
        %691 = vmatprep.subr.bf16.mxu0 0
        %692 = vmatpush2.bf16.msra.mxu0 0
        %693 = vmatprep.subr.bf16.mxu0 0
        %694 = vmatpush2.bf16.msra.mxu0 0
        %695 = vmatprep.subr.bf16.mxu0 0
        %696 = vmatpush2.bf16.msra.mxu0 0
        %697 = vmatprep.subr.bf16.mxu0 0
        %698 = vmatpush2.bf16.msra.mxu0 0
        %699 = vmatprep.subr.bf16.mxu0 0
        %700 = vmatpush2.bf16.msra.mxu0 0
        %701 = vmatprep.subr.bf16.mxu0 0
        %702 = vmatpush2.bf16.msra.mxu0 0
        %703 = vmatprep.subr.bf16.mxu0 0
        %704 = vmatpush2.bf16.msra.mxu0 0
        %705 = vmatprep.mubr.bf16.mxu0 0
        %706 = vmatmul.mubr.bf16.gmra.mxu0 %v561
        %v707 = vpop.f32.mrf.mxu0
        %v708 = vadd.f32 %v586, %v707
        %v709 = vpop.f32.mrf.mxu0
        %v710 = vadd.f32 %v590, %v709
        %v711 = vpop.f32.mrf.mxu0
        %v712 = vadd.f32 %v586, %v711
        %v713 = vpop.f32.mrf.mxu0
        %v714 = vadd.f32 %v590, %v713
        %715 = vmatprep.mubr.bf16.mxu0 0
        %716 = vmatmul.mubr.bf16.gmra.mxu0 %v562
        %v717 = vpop.f32.mrf.mxu0
        %v718 = vadd.f32 %v586, %v717
        %v719 = vpop.f32.mrf.mxu0
        %v720 = vadd.f32 %v590, %v719
        %v721 = vpop.f32.mrf.mxu0
        %v722 = vadd.f32 %v586, %v721
        %v723 = vpop.f32.mrf.mxu0
        %v724 = vadd.f32 %v590, %v723
        %725 = vmatprep.mubr.bf16.mxu0 0
        %726 = vmatmul.mubr.bf16.gmra.mxu0 %v563
        %v727 = vpop.f32.mrf.mxu0
        %v728 = vadd.f32 %v586, %v727
        %v729 = vpop.f32.mrf.mxu0
        %v730 = vadd.f32 %v590, %v729
        %v731 = vpop.f32.mrf.mxu0
        %v732 = vadd.f32 %v586, %v731
        %v733 = vpop.f32.mrf.mxu0
        %v734 = vadd.f32 %v590, %v733
        %735 = vmatprep.mubr.bf16.mxu0 0
        %736 = vmatmul.mubr.bf16.gmra.mxu0 %v564
        %v737 = vpop.f32.mrf.mxu0
        %v738 = vadd.f32 %v586, %v737
        %v739 = vpop.f32.mrf.mxu0
        %v740 = vadd.f32 %v590, %v739
        %v741 = vpop.f32.mrf.mxu0
        %v742 = vadd.f32 %v586, %v741
        %v743 = vpop.f32.mrf.mxu0
        %v744 = vadd.f32 %v590, %v743
        %745 = vdwg.mxu0
        %v746 = vpack.c.bf16 %v712, %v708
        %v747 = vpack.c.bf16 %v714, %v710
        %v748 = vpack.c.bf16 %v722, %v718
        %v749 = vpack.c.bf16 %v724, %v720
        %v750 = vpack.c.bf16 %v732, %v728
        %v751 = vpack.c.bf16 %v734, %v730
        %v752 = vpack.c.bf16 %v742, %v738
        %v753 = vpack.c.bf16 %v744, %v740
        // Predicated region
        $region49: #{hetero_align_forward.1} parent=39 // pred_check
          %p754 = pneg %p364
        $region50: #{hetero_align_forward.1} parent=39 // pred_check_branch
          %756 = sbr.rel (%p754) target = $region52
        $region51: #{hetero_align_forward.1} parent=39 // pred_region
          %v765 = vunpack.c.l.b16 %v746
          %v766 = vunpack.c.l.b16 %v747
          %v767 = vunpack.c.h.b16 %v746
          %v768 = vunpack.c.h.b16 %v747
          %v769 = vunpack.c.l.b16 %v748
          %v770 = vunpack.c.l.b16 %v749
          %v771 = vunpack.c.h.b16 %v748
          %v772 = vunpack.c.h.b16 %v749
          %v773 = vunpack.c.l.b16 %v750
          %v774 = vunpack.c.l.b16 %v751
          %v775 = vunpack.c.h.b16 %v750
          %v776 = vunpack.c.h.b16 %v751
          %v777 = vunpack.c.l.b16 %v752
          %v778 = vunpack.c.l.b16 %v753
          %v779 = vunpack.c.h.b16 %v752
          %v780 = vunpack.c.h.b16 %v753
          %v781 = vpack.c.b16 %v766, %v765
          %v782 = vpack.c.b16 %v768, %v767
          %v783 = vpack.c.b16 %v770, %v769
          %v784 = vpack.c.b16 %v772, %v771
          %v785 = vpack.c.b16 %v774, %v773
          %v786 = vpack.c.b16 %v776, %v775
          %v787 = vpack.c.b16 %v778, %v777
          %v788 = vpack.c.b16 %v780, %v779
          %797 = vst [vmem:[%s322] sm:$0xff] %v781
          %798 = vst [vmem:[%s322 + $0x8] sm:$0xff] %v782
          %799 = vst [vmem:[%s322 + $0x10] sm:$0xff] %v783
          %800 = vst [vmem:[%s322 + $0x18] sm:$0xff] %v784
          %801 = vst [vmem:[%s322 + $0x20] sm:$0xff] %v785
          %802 = vst [vmem:[%s322 + $0x28] sm:$0xff] %v786
          %803 = vst [vmem:[%s322 + $0x30] sm:$0xff] %v787
          %804 = vst [vmem:[%s322 + $0x38] sm:$0xff] %v788
        $region52: #{hetero_align_forward.1} parent=39 // pred_fallthru
          _
        %p805 = scmp.ne.s32.totalorder %s363, 1
        // Predicated region
        $region53: #{hetero_align_forward.1} parent=39 // pred_check
          %p806 = pneg %p805
        $region54: #{hetero_align_forward.1} parent=39 // pred_check_branch
          %808 = sbr.rel (%p806) target = $region56
        $region55: #{hetero_align_forward.1} parent=39 // pred_region
          %v817 = vunpack.c.l.b16 %v746
          %v818 = vunpack.c.l.b16 %v747
          %v819 = vunpack.c.h.b16 %v746
          %v820 = vunpack.c.h.b16 %v747
          %v821 = vunpack.c.l.b16 %v748
          %v822 = vunpack.c.l.b16 %v749
          %v823 = vunpack.c.h.b16 %v748
          %v824 = vunpack.c.h.b16 %v749
          %v825 = vunpack.c.l.b16 %v750
          %v826 = vunpack.c.l.b16 %v751
          %v827 = vunpack.c.h.b16 %v750
          %v828 = vunpack.c.h.b16 %v751
          %v829 = vunpack.c.l.b16 %v752
          %v830 = vunpack.c.l.b16 %v753
          %v831 = vunpack.c.h.b16 %v752
          %v832 = vunpack.c.h.b16 %v753
          %v833 = vpack.c.b16 %v818, %v817
          %v834 = vpack.c.b16 %v820, %v819
          %v835 = vpack.c.b16 %v822, %v821
          %v836 = vpack.c.b16 %v824, %v823
          %v837 = vpack.c.b16 %v826, %v825
          %v838 = vpack.c.b16 %v828, %v827
          %v839 = vpack.c.b16 %v830, %v829
          %v840 = vpack.c.b16 %v832, %v831
          %849 = vst [vmem:[%s357] sm:$0xff] %v833
          %850 = vst [vmem:[%s357 + $0x8] sm:$0xff] %v834
          %851 = vst [vmem:[%s357 + $0x10] sm:$0xff] %v835
          %852 = vst [vmem:[%s357 + $0x18] sm:$0xff] %v836
          %853 = vst [vmem:[%s357 + $0x20] sm:$0xff] %v837
          %854 = vst [vmem:[%s357 + $0x28] sm:$0xff] %v838
          %855 = vst [vmem:[%s357 + $0x30] sm:$0xff] %v839
          %856 = vst [vmem:[%s357 + $0x38] sm:$0xff] %v840
        $region56: #{hetero_align_forward.1} parent=39 // pred_fallthru
          _
        %s857 = sand.u32 %s167, 1
        %s858 = scalar_lea.sflag [#allocation7], %s857
        %s859 = sand.u32 %s167, 1
        %s860 = smul.addr %s859, 64
        %s861 = scalar_lea.vmem [#allocation8], %s860
        %s862 = ssub.s32 %s31, 1
        %p863 = scmp.gt.s32.totalorder %s862, 0
        %s864 = scalar_select %p863, %s862, 0
        %s865 = smul.u32 8, %s864
        %p866 = scmp.lt.s32.totalorder %s865, 7
        %s867 = scalar_select %p866, %s865, 7
        %s868 = smul.addr %s867, 2
        %s869 = smul.addr %s868, 4
        %s870 = scalar_lea.vmem %s7, %s869
        // Predicated region
        $region57: #{hetero_align_forward.1} parent=39 // pred_check
          %p871 = pneg %p177
        $region58: #{hetero_align_forward.1} parent=39 // pred_check_branch
          %873 = sbr.rel (%p871) target = $region60
        $region59: #{hetero_align_forward.1} parent=39 // pred_region
          %p874 = scmp.lt.s32.totalorder %s31, 0
          %s875 = scalar_select %p874, %s31, 0
          %s876 = smul.u32 8, %s875
          %s878 = ssub.s32 1024, 1024
          %879 = vsyncadd %s858, %s878
          %s880 = smul.addr %s876, 2
          %s881 = smul.addr %s880, 64
          %s882 = scalar_lea.hbm %s6, %s881
          %s883 = sshll.u32 %s861, 4
          %s884 = int_to_ptr.vmem [resolvable:$true] %s883
          %889 = dma.vmem_to_hbm [thread:$0]  %s884, 1024, %s882, %s858, 128, 128, 8
        $region60: #{hetero_align_forward.1} parent=39 // pred_fallthru
          _
        // Predicated region
        $region61: #{hetero_align_forward.1} parent=39 // pred_check
          %p890 = pneg %p209
        $region62: #{hetero_align_forward.1} parent=39 // pred_check_branch
          %892 = sbr.rel (%p890) target = $region64
        $region63: #{hetero_align_forward.1} parent=39 // pred_region
          %s893 = ssub.s32 %s31, 1
          %p894 = scmp.gt.s32.totalorder %s893, 0
          %s895 = scalar_select %p894, %s893, 0
          %s896 = smul.u32 8, %s895
        $region64: #{hetero_align_forward.1} parent=39 // pred_fallthru
          _
      $region40: #{hetero_align_forward.1} parent=5 // pred_fallthru
        _
      %p897 = scmp.le.s32.totalorder 2, %s26
      // Predicated region
      $region65: #{hetero_align_forward.1} parent=5 // pred_check
        %p898 = pneg %p897
      $region66: #{hetero_align_forward.1} parent=5 // pred_check_branch
        %900 = sbr.rel (%p898) target = $region68
      $region67: #{hetero_align_forward.1} parent=5 // pred_region
        %s901 = ssub.s32 %s26, 2
        // Predicated region
        $region69: #{hetero_align_forward.1} parent=67 // pred_check
          %p902 = pneg %p183
        $region70: #{hetero_align_forward.1} parent=67 // pred_check_branch
          %904 = sbr.rel (%p902) target = $region72
        $region71: #{hetero_align_forward.1} parent=67 // pred_region
          %s905 = sand.u32 %s168, 1
          %s906 = scalar_lea.sflag [#allocation7], %s905
          %s907 = sand.u32 %s168, 1
          %s908 = smul.addr %s907, 64
          %s909 = scalar_lea.vmem [#allocation8], %s908
          %910 = dma.done %s906, 1024
        $region72: #{hetero_align_forward.1} parent=67 // pred_fallthru
          _
        // Predicated region
        $region73: #{hetero_align_forward.1} parent=67 // pred_check
          %p911 = pneg %p215
        $region74: #{hetero_align_forward.1} parent=67 // pred_check_branch
          %913 = sbr.rel (%p911) target = $region76
        $region75: #{hetero_align_forward.1} parent=67 // pred_region
          %s914 = ssub.s32 %s32, 1
          %p915 = scmp.gt.s32.totalorder %s914, 0
          %s916 = scalar_select %p915, %s914, 0
          %s917 = smul.u32 8, %s916
          %p918 = scmp.lt.s32.totalorder %s917, 7
          %s919 = scalar_select %p918, %s917, 7
          %s920 = smul.addr %s919, 2
          %s921 = smul.addr %s920, 4
          %s922 = scalar_lea.vmem %s7, %s921
        $region76: #{hetero_align_forward.1} parent=67 // pred_fallthru
          _
      $region68: #{hetero_align_forward.1} parent=5 // pred_fallthru
        _
    $region6: #{hetero_align_forward.1} parent=1 // loop_footer
      %s30 = sadd.s32 1, %s26
    $region7: #{hetero_align_forward.1} parent=1 // loop_footer_branch
      %25 = sbr.rel target = $region3
    $region8: #{hetero_align_forward.1} parent=1 // loop_exit
      _
    %923 = vsyncpa [#allocation6], 1
    %s924 = scalar_lea.sflag [#allocation6], 1
    %925 = vsyncpa %s924, 1
    %926 = vsyncpa [#allocation7], 1
    %s927 = scalar_lea.sflag [#allocation7], 1
    %928 = vsyncpa %s927, 1

</llo_original>
